<compile_context>
chip_gen: v5e
topology: v5e:2x2
jax: 0.10.0
libtpu: 0.0.40
codegen_flags: <defaults>
</compile_context>

<pallas_src>
import math
from functools import partial

import jax
import jax.numpy as jnp
from jax import lax
from jax.experimental import pallas as pl
from jax.experimental.pallas import tpu as pltpu


_INV_SQRT2 = 1.0 / math.sqrt(2.0)
_SQRT_2_OVER_PI = math.sqrt(2.0 / math.pi)


def _gelu(x, approximate=False):
    if approximate:
        # tanh form -> EUP slot; only use when VALU-bound (changes numerics ~1e-3).
        return 0.5 * x * (1.0 + jnp.tanh(_SQRT_2_OVER_PI * (x + 0.044715 * x * x * x)))
    # PyTorch nn.GELU() default: exact erf formulation.
    return 0.5 * x * (1.0 + lax.erf(x * _INV_SQRT2))


def encoder_kernel(x_ref, w1_ref, sh1_ref, w2_ref, sh2_ref, o_ref, *, approximate_gelu):
    # BN scale is pre-folded into the bf16 weights; each layer is dot -> +shift -> GELU.
    x = x_ref[...].astype(jnp.bfloat16)  # no-op when the wrapper already fed bf16
    h = jnp.dot(x, w1_ref[...], preferred_element_type=jnp.float32)
    h = _gelu(h + sh1_ref[...], approximate_gelu)

    # TODO(synk): Dropout(p=0.2) is identity in inference (eval) mode.

    h = jnp.dot(h.astype(jnp.bfloat16), w2_ref[...],
                preferred_element_type=jnp.float32)
    o_ref[...] = _gelu(h + sh2_ref[...], approximate_gelu).astype(o_ref.dtype)


def _round_up(n, m):
    return ((n + m - 1) // m) * m


def _cdiv(a, b):
    return -(-a // b)


def _vmem_limit_bytes():
    """~75% of physical VMEM (v5e/v6e: 96 MiB cap, v7x: ~48 MiB)."""
    try:
        cap = pltpu.get_tpu_info().vmem_capacity_bytes
        return int(min(96 * 1024 * 1024, cap * 3 // 4))
    except Exception:
        return 48 * 1024 * 1024  # conservative: safe on every generation


def encoder_forward(x, params, *, tm=512, out_dtype=jnp.float32,
                    approximate_gelu=False):
    """x: (B, D) float32.  params: dict of weights + folded BN (see init_params)."""
    B, D = x.shape
    H2 = params["w1"].shape[1]
    H = params["w2"].shape[1]

    # Lane-align feature dims (multiples of 128) -> dense, unmasked loads/stores.
    Dp = _round_up(D, 128)
    H2p = _round_up(H2, 128)
    Hp = _round_up(H, 128)

    vmem_limit = _vmem_limit_bytes()
    out_bytes = jnp.dtype(out_dtype).itemsize

    # Grid-invariant VMEM residents (bf16 weights + f32 shifts, double-buffered
    # by the default pipeline).
    fixed_bytes = 2 * 2 * (Dp * H2p + H2p * Hp) + 2 * 4 * (H2p + Hp)
    # Per-batch-row VMEM: double-buffered x / out tiles + f32 working set.
    per_row = 2 * 4 * Dp + 2 * out_bytes * Hp + 4 * (H2p + Hp)
    if fixed_bytes + 16 * per_row > vmem_limit:
        # TODO(synk): tile the output-feature dim (Hp) when the full weights do
        # not fit resident in VMEM (needed earlier on v7x's 64 MiB budget).
        raise NotImplementedError(
            "encoder weights do not fit resident in VMEM; Hp tiling not implemented")
    budget = vmem_limit - fixed_bytes - (1 << 20)  # 1 MiB slack
    max_tm = max(16, min(budget // per_row, 4096) // 16 * 16)
    tm = min(tm, max_tm)

    # Batch tiling: multiples of 16 rows (bf16 sublane packing).  Medium/large
    # batches always get >=2 grid steps so both v7x TensorCores are used; the
    # tile is right-sized to ceil(B / n_steps) instead of padding to a fixed tm.
    Bp16 = _round_up(B, 16)
    if Bp16 <= 32:
        tm_eff, Bp = Bp16, Bp16
    else:
        n_steps = max(2, _cdiv(Bp16, tm))
        tm_eff = _round_up(_cdiv(Bp16, n_steps), 16)
        Bp = tm_eff * n_steps
    grid = (Bp // tm_eff,)

    # Host-side weight prep: fold BN scale in f32, pad, cast to bf16.  Padded
    # columns/rows carry zero weight / zero shift (GELU(0)=0), sliced off below.
    w1 = jnp.pad(params["w1"] * params["sc1"],
                 ((0, Dp - D), (0, H2p - H2))).astype(jnp.bfloat16)
    w2 = jnp.pad(params["w2"] * params["sc2"],
                 ((0, H2p - H2), (0, Hp - H))).astype(jnp.bfloat16)
    sh1 = jnp.pad(params["sh1"], ((0, 0), (0, H2p - H2))).astype(jnp.float32)
    sh2 = jnp.pad(params["sh2"], ((0, 0), (0, Hp - H))).astype(jnp.float32)

    # x: fast path (no extra HBM pass) when already tile/lane aligned; the
    # kernel casts the VMEM tile to bf16.  Otherwise pad+cast once on the host.
    if B == Bp and D == Dp:
        xb = x
        x_bytes = jnp.dtype(x.dtype).itemsize
    else:
        xb = jnp.pad(x, ((0, Bp - B), (0, Dp - D))).astype(jnp.bfloat16)
        x_bytes = 2

    cost = pl.CostEstimate(
        flops=2 * Bp * (Dp * H2p + H2p * Hp),
        transcendentals=Bp * (H2p + Hp),
        bytes_accessed=(Bp * Dp * x_bytes + Bp * Hp * out_bytes       # x in, out
                        + (Dp * H2p + H2p * Hp) * 2                   # bf16 weights
                        + (H2p + Hp) * 4),                            # shifts
    )

    # Constant-index blocks (weights / shifts): resident across the grid.
    const_spec = lambda shape: pl.BlockSpec(shape, lambda i: (0, 0))

    out = pl.pallas_call(
        partial(encoder_kernel, approximate_gelu=approximate_gelu),
        out_shape=jax.ShapeDtypeStruct((Bp, Hp), out_dtype),
        grid_spec=pltpu.PrefetchScalarGridSpec(
            num_scalar_prefetch=0,
            grid=grid,
            in_specs=[
                pl.BlockSpec((tm_eff, Dp), lambda i: (i, 0)),  # x tile
                const_spec((Dp, H2p)),                         # w1 (scale-folded, bf16)
                const_spec((1, H2p)),                          # bn1 shift (+bias)
                const_spec((H2p, Hp)),                         # w2 (scale-folded, bf16)
                const_spec((1, Hp)),                           # bn2 shift (+bias)
            ],
            out_specs=pl.BlockSpec((tm_eff, Hp), lambda i: (i, 0)),
        ),
        compiler_params=pltpu.CompilerParams(
            dimension_semantics=("parallel",),
            vmem_limit_bytes=vmem_limit,
        ),
        cost_estimate=cost,
    )(xb, w1, sh1, w2, sh2)

    if B == Bp and H == Hp:
        return out                # aligned fast path: no output slice pass
    return out[:B, :H]


def init_params(key, input_dim, encoder_hidden_dim, eps=1e-5):
    """Deterministic synthetic parameters; BatchNorm folded into scale/shift."""
    H2 = encoder_hidden_dim // 2
    H = encoder_hidden_dim
    ks = jax.random.split(key, 12)

    # Linear weights stored transposed vs. PyTorch: (in, out).
    w1 = jax.random.normal(ks[0], (input_dim, H2), jnp.float32) * 0.05
    b1 = jax.random.normal(ks[1], (H2,), jnp.float32) * 0.05
    w2 = jax.random.normal(ks[2], (H2, H), jnp.float32) * 0.05
    b2 = jax.random.normal(ks[3], (H,), jnp.float32) * 0.05

    # BatchNorm1d parameters / running statistics (eval mode).
    g1 = 1.0 + 0.1 * jax.random.normal(ks[4], (H2,), jnp.float32)
    beta1 = 0.1 * jax.random.normal(ks[5], (H2,), jnp.float32)
    mean1 = 0.1 * jax.random.normal(ks[6], (H2,), jnp.float32)
    var1 = jnp.abs(1.0 + 0.1 * jax.random.normal(ks[7], (H2,), jnp.float32))

    g2 = 1.0 + 0.1 * jax.random.normal(ks[8], (H,), jnp.float32)
    beta2 = 0.1 * jax.random.normal(ks[9], (H,), jnp.float32)
    mean2 = 0.1 * jax.random.normal(ks[10], (H,), jnp.float32)
    var2 = jnp.abs(1.0 + 0.1 * jax.random.normal(ks[11], (H,), jnp.float32))

    # Fold:  gamma * (x@W + b - mean) / sqrt(var+eps) + beta  ==  (x@W)*sc + sh
    sc1 = g1 / jnp.sqrt(var1 + eps)
    sh1 = (b1 - mean1) * sc1 + beta1
    sc2 = g2 / jnp.sqrt(var2 + eps)
    sh2 = (b2 - mean2) * sc2 + beta2

    return {
        "w1": w1, "sc1": sc1.reshape(1, H2), "sh1": sh1.reshape(1, H2),
        "w2": w2, "sc2": sc2.reshape(1, H), "sh2": sh2.reshape(1, H),
    }


def encoder_reference(x, params):
    h = x @ params["w1"]
    h = h * params["sc1"] + params["sh1"]
    h = 0.5 * h * (1.0 + lax.erf(h / math.sqrt(2.0)))
    h = h @ params["w2"]
    h = h * params["sc2"] + params["sh2"]
    return 0.5 * h * (1.0 + lax.erf(h / math.sqrt(2.0)))


if __name__ == "__main__":
    key = jax.random.PRNGKey(0)
    k_x, k_p = jax.random.split(key)

    # 1) Small single-tile path (batch padded to 16 rows, features to 128 lanes).
    batch = 8
    input_dim = 32           # small stand-in for 768
    encoder_hidden_dim = 64  # -> hidden 32, output 64
    x = jax.random.normal(k_x, (batch, input_dim), jnp.float32)
    params = init_params(k_p, input_dim, encoder_hidden_dim)
    out = jax.block_until_ready(encoder_forward(x, params))
    ref = encoder_reference(x, params)
    assert out.shape == (batch, encoder_hidden_dim)
    assert jnp.allclose(out, ref, atol=2e-2, rtol=2e-2), float(
        jnp.max(jnp.abs(out - ref)))

    # 2) Ragged multi-step pipelined grid (batch=40 -> 3 tiles of 16 rows).
    x2 = jax.random.normal(jax.random.PRNGKey(1), (40, input_dim), jnp.float32)
    out2 = jax.block_until_ready(encoder_forward(x2, params, tm=16))
    ref2 = encoder_reference(x2, params)
    assert out2.shape == (40, encoder_hidden_dim)
    assert jnp.allclose(out2, ref2, atol=2e-2, rtol=2e-2), float(
        jnp.max(jnp.abs(out2 - ref2)))

    # 3) Aligned fast path (no x pad/cast, no output slice, >=2 grid steps).
    input_dim3, hidden3, batch3 = 128, 256, 64
    params3 = init_params(jax.random.PRNGKey(2), input_dim3, hidden3)
    x3 = jax.random.normal(jax.random.PRNGKey(3), (batch3, input_dim3), jnp.float32)
    out3 = jax.block_until_ready(encoder_forward(x3, params3))
    ref3 = encoder_reference(x3, params3)
    assert out3.shape == (batch3, hidden3)
    assert jnp.allclose(out3, ref3, atol=2e-2, rtol=2e-2), float(
        jnp.max(jnp.abs(out3 - ref3)))

    print("KERNEL_OK")
</pallas_src>

<mosaic_0001>
module attributes {stable_mosaic.version = 11 : i64} {
  func.func @encoder_kernel(%arg0: i32, %arg1: memref<16x128xbf16, #tpu.memory_space<vmem>>, %arg2: memref<128x128xbf16, #tpu.memory_space<vmem>>, %arg3: memref<1x128xf32, #tpu.memory_space<vmem>>, %arg4: memref<128x128xbf16, #tpu.memory_space<vmem>>, %arg5: memref<1x128xf32, #tpu.memory_space<vmem>>, %arg6: memref<16x128xf32, #tpu.memory_space<vmem>>) attributes {dimension_semantics = [#tpu.dimension_semantics<parallel>], iteration_bounds = array<i64: 1>, scalar_prefetch = 0 : i64, scratch_operands = 0 : i64, tpu.core_type = #tpu.core_type<tc>, window_params = [{transform_indices = @transform_0, window_bounds = array<i64: 16, 128>}, {pipeline_mode = #tpu.pipeline_mode<synchronous>, transform_indices = @transform_1, window_bounds = array<i64: 128, 128>}, {pipeline_mode = #tpu.pipeline_mode<synchronous>, transform_indices = @transform_2, window_bounds = array<i64: 1, 128>}, {pipeline_mode = #tpu.pipeline_mode<synchronous>, transform_indices = @transform_3, window_bounds = array<i64: 128, 128>}, {pipeline_mode = #tpu.pipeline_mode<synchronous>, transform_indices = @transform_4, window_bounds = array<i64: 1, 128>}, {transform_indices = @transform_5, window_bounds = array<i64: 16, 128>}]} {
    %c0 = arith.constant 0 : index
    %c0_0 = arith.constant 0 : index
    %0 = vector.load %arg1[%c0, %c0_0] : memref<16x128xbf16, #tpu.memory_space<vmem>>, vector<16x128xbf16>
    %c0_1 = arith.constant 0 : index
    %c0_2 = arith.constant 0 : index
    %1 = vector.load %arg2[%c0_1, %c0_2] : memref<128x128xbf16, #tpu.memory_space<vmem>>, vector<128x128xbf16>
    %cst = arith.constant dense<0.000000e+00> : vector<16x128xf32>
    %2 = tpu.matmul %0, %1, %cst {dimension_numbers = #tpu.dot_dimension_numbers<[1], [0], [0], [1], [0, 0, 1, 1], [], []>} : vector<16x128xbf16>, vector<128x128xbf16>, vector<16x128xf32> -> vector<16x128xf32>
    %c0_3 = arith.constant 0 : index
    %c0_4 = arith.constant 0 : index
    %3 = vector.load %arg3[%c0_3, %c0_4] : memref<1x128xf32, #tpu.memory_space<vmem>>, vector<1x128xf32>
    %4 = vector.broadcast %3 : vector<1x128xf32> to vector<16x128xf32>
    %5 = arith.addf %2, %4 : vector<16x128xf32>
    %cst_5 = arith.constant 5.000000e-01 : f32
    %6 = vector.broadcast %cst_5 : f32 to vector<16x128xf32>
    %7 = arith.mulf %6, %5 : vector<16x128xf32>
    %cst_6 = arith.constant 0.707106769 : f32
    %8 = vector.broadcast %cst_6 : f32 to vector<16x128xf32>
    %9 = arith.mulf %5, %8 : vector<16x128xf32>
    %10 = math.erf %9 : vector<16x128xf32>
    %cst_7 = arith.constant 1.000000e+00 : f32
    %11 = vector.broadcast %cst_7 : f32 to vector<16x128xf32>
    %12 = arith.addf %11, %10 : vector<16x128xf32>
    %13 = arith.mulf %7, %12 : vector<16x128xf32>
    %14 = arith.truncf %13 : vector<16x128xf32> to vector<16x128xbf16>
    %c0_8 = arith.constant 0 : index
    %c0_9 = arith.constant 0 : index
    %15 = vector.load %arg4[%c0_8, %c0_9] : memref<128x128xbf16, #tpu.memory_space<vmem>>, vector<128x128xbf16>
    %cst_10 = arith.constant dense<0.000000e+00> : vector<16x128xf32>
    %16 = tpu.matmul %14, %15, %cst_10 {dimension_numbers = #tpu.dot_dimension_numbers<[1], [0], [0], [1], [0, 0, 1, 1], [], []>} : vector<16x128xbf16>, vector<128x128xbf16>, vector<16x128xf32> -> vector<16x128xf32>
    %c0_11 = arith.constant 0 : index
    %c0_12 = arith.constant 0 : index
    %17 = vector.load %arg5[%c0_11, %c0_12] : memref<1x128xf32, #tpu.memory_space<vmem>>, vector<1x128xf32>
    %18 = vector.broadcast %17 : vector<1x128xf32> to vector<16x128xf32>
    %19 = arith.addf %16, %18 : vector<16x128xf32>
    %cst_13 = arith.constant 5.000000e-01 : f32
    %20 = vector.broadcast %cst_13 : f32 to vector<16x128xf32>
    %21 = arith.mulf %20, %19 : vector<16x128xf32>
    %cst_14 = arith.constant 0.707106769 : f32
    %22 = vector.broadcast %cst_14 : f32 to vector<16x128xf32>
    %23 = arith.mulf %19, %22 : vector<16x128xf32>
    %24 = math.erf %23 : vector<16x128xf32>
    %cst_15 = arith.constant 1.000000e+00 : f32
    %25 = vector.broadcast %cst_15 : f32 to vector<16x128xf32>
    %26 = arith.addf %25, %24 : vector<16x128xf32>
    %27 = arith.mulf %21, %26 : vector<16x128xf32>
    %c0_16 = arith.constant 0 : index
    %c0_17 = arith.constant 0 : index
    %28 = vector.load %arg6[%c0_16, %c0_17] : memref<16x128xf32, #tpu.memory_space<vmem>>, vector<16x128xf32>
    tpu.vector_store %arg6[%c0_16, %c0_17], %27 {strides = array<i32>} : memref<16x128xf32, #tpu.memory_space<vmem>>, vector<16x128xf32>,
    return
  }
  func.func @transform_0(%arg0: i32) -> (i32, i32) {
    %c0_i32 = arith.constant 0 : i32
    %c0_i32_0 = arith.constant 0 : i32
    return %arg0, %c0_i32 : i32, i32
  }
  func.func @transform_1(%arg0: i32) -> (i32, i32) {
    %c0_i32 = arith.constant 0 : i32
    %c0_i32_0 = arith.constant 0 : i32
    %c0_i32_1 = arith.constant 0 : i32
    return %c0_i32, %c0_i32_0 : i32, i32
  }
  func.func @transform_2(%arg0: i32) -> (i32, i32) {
    %c0_i32 = arith.constant 0 : i32
    %c0_i32_0 = arith.constant 0 : i32
    %c0_i32_1 = arith.constant 0 : i32
    return %c0_i32, %c0_i32_0 : i32, i32
  }
  func.func @transform_3(%arg0: i32) -> (i32, i32) {
    %c0_i32 = arith.constant 0 : i32
    %c0_i32_0 = arith.constant 0 : i32
    %c0_i32_1 = arith.constant 0 : i32
    return %c0_i32, %c0_i32_0 : i32, i32
  }
  func.func @transform_4(%arg0: i32) -> (i32, i32) {
    %c0_i32 = arith.constant 0 : i32
    %c0_i32_0 = arith.constant 0 : i32
    %c0_i32_1 = arith.constant 0 : i32
    return %c0_i32, %c0_i32_0 : i32, i32
  }
  func.func @transform_5(%arg0: i32) -> (i32, i32) {
    %c0_i32 = arith.constant 0 : i32
    %c0_i32_0 = arith.constant 0 : i32
    return %arg0, %c0_i32 : i32, i32
  }
}

</mosaic_0001>

<llo_original>
// kernel: tpu_custom_call.1
$region0: #{tpu_custom_call.1}
  #allocation0 [shape = 'u32[]', space=smem, size = 0x4, offset = 0x4, fixed_abs, tag = 'smem constant byte address 0x4 - core index']
  #allocation1 [shape = 'u32[72,128]{1,0:T(1,128)}', space=vmem, size = 0x9000, scoped, tag = 'internal scratch']
  %s0 = inlined_call_operand.hbm [shape: bf16[16,128], index: 0, kind: input, shape index: {}]
  %s1 = inlined_call_operand.hbm [shape: bf16[128,128], index: 1, kind: input, shape index: {}]
  %s2 = inlined_call_operand.vmem [shape: f32[1,128], index: 2, kind: input, shape index: {}]
  %s3 = inlined_call_operand.hbm [shape: bf16[128,128], index: 3, kind: input, shape index: {}]
  %s4 = inlined_call_operand.vmem [shape: f32[1,128], index: 4, kind: input, shape index: {}]
  %s5 = inlined_call_operand.hbm [shape: f32[16,128], index: 5, kind: output, shape index: {}]
  %s6 = sld [smem:[#allocation0]]
  $region42: #{tpu_custom_call.1} parent=0
    _
  %s8 = ssub.s32 1, %s6
  %s9 = scalar_select 0, %s8, %s6
  $region1: #{tpu_custom_call.1} parent=0
    #allocation2 [shape = 'u8[4096]{0}', space=vmem, size = 0x1000, scoped, tag = 'input window, operand 0, single buffered']
    #allocation3 [shape = 's32[1]{0}', space=sflag, size = 0x4, scoped, tag = 'scoped memory for tpu_custom_call.1']
    #allocation4 [shape = 's32[1]{0}', space=sflag, size = 0x4, scoped, tag = 'scoped memory for tpu_custom_call.1']
    #allocation5 [shape = 'u8[32768]{0}', space=vmem, size = 0x8000, scoped, tag = 'input window, operand 1, single buffered']
    #allocation6 [shape = 's32[1]{0}', space=sflag, size = 0x4, scoped, tag = 'scoped memory for tpu_custom_call.1']
    #allocation7 [shape = 'u8[32768]{0}', space=vmem, size = 0x8000, scoped, tag = 'input window, operand 3, single buffered']
    #allocation8 [shape = 'u8[8192]{0}', space=vmem, size = 0x2000, scoped, tag = 'output window, operand 0, single buffered']
    %10 = vsyncpa [#allocation3], 0
    %11 = vsyncpa [#allocation6], 0
    %12 = vsyncpa [#allocation4], 0
    // Predicated region
    $region2: #{tpu_custom_call.1} parent=1 // pred_check
      _
    $region3: #{tpu_custom_call.1} parent=1 // pred_check_branch
      %14 = sbr.rel (0) target = $region5
    $region4: #{tpu_custom_call.1} parent=1 // pred_region
      %16 = vsyncadd [#allocation3], 0
      %s17 = sshll.u32 %s0, 4
      %s18 = int_to_ptr.hbm [resolvable:$true] %s17
      %s19 = sshll.u32 [#allocation2], 4
      %s20 = int_to_ptr.vmem [resolvable:$true] %s19
      %25 = dma.hbm_to_vmem [thread:$0]  %s18, 128, %s20, [#allocation3], 64, 64, 4
    $region5: #{tpu_custom_call.1} parent=1 // pred_fallthru
      _
    // Predicated region
    $region6: #{tpu_custom_call.1} parent=1 // pred_check
      _
    $region7: #{tpu_custom_call.1} parent=1 // pred_check_branch
      %27 = sbr.rel (0) target = $region9
    $region8: #{tpu_custom_call.1} parent=1 // pred_region
      %29 = vsyncadd [#allocation6], 0
      %s30 = sshll.u32 %s1, 4
      %s31 = int_to_ptr.hbm [resolvable:$true] %s30
      %s32 = sshll.u32 [#allocation5], 4
      %s33 = int_to_ptr.vmem [resolvable:$true] %s32
      %38 = dma.hbm_to_vmem [thread:$0]  %s31, 1024, %s33, [#allocation6], 64, 64, 4
    $region9: #{tpu_custom_call.1} parent=1 // pred_fallthru
      _
    // Predicated region
    $region10: #{tpu_custom_call.1} parent=1 // pred_check
      _
    $region11: #{tpu_custom_call.1} parent=1 // pred_check_branch
      %40 = sbr.rel (0) target = $region13
    $region12: #{tpu_custom_call.1} parent=1 // pred_region
      _
    $region13: #{tpu_custom_call.1} parent=1 // pred_fallthru
      _
    // Predicated region
    $region14: #{tpu_custom_call.1} parent=1 // pred_check
      _
    $region15: #{tpu_custom_call.1} parent=1 // pred_check_branch
      %42 = sbr.rel (0) target = $region17
    $region16: #{tpu_custom_call.1} parent=1 // pred_region
      %44 = vsyncadd [#allocation6], 0
      %s45 = sshll.u32 %s3, 4
      %s46 = int_to_ptr.hbm [resolvable:$true] %s45
      %s47 = sshll.u32 [#allocation7], 4
      %s48 = int_to_ptr.vmem [resolvable:$true] %s47
      %53 = dma.hbm_to_vmem [thread:$0]  %s46, 1024, %s48, [#allocation6], 64, 64, 4
    $region17: #{tpu_custom_call.1} parent=1 // pred_fallthru
      _
    // Predicated region
    $region18: #{tpu_custom_call.1} parent=1 // pred_check
      _
    $region19: #{tpu_custom_call.1} parent=1 // pred_check_branch
      %55 = sbr.rel (0) target = $region21
    $region20: #{tpu_custom_call.1} parent=1 // pred_region
      _
    $region21: #{tpu_custom_call.1} parent=1 // pred_fallthru
      _
    // Predicated region
    $region22: #{tpu_custom_call.1} parent=1 // pred_check
      _
    $region23: #{tpu_custom_call.1} parent=1 // pred_check_branch
      %57 = sbr.rel (0) target = $region25
    $region24: #{tpu_custom_call.1} parent=1 // pred_region
      %59 = dma.done [#allocation3], 128
    $region25: #{tpu_custom_call.1} parent=1 // pred_fallthru
      _
    // Predicated region
    $region26: #{tpu_custom_call.1} parent=1 // pred_check
      _
    $region27: #{tpu_custom_call.1} parent=1 // pred_check_branch
      %61 = sbr.rel (0) target = $region29
    $region28: #{tpu_custom_call.1} parent=1 // pred_region
      %63 = dma.done [#allocation6], 1024
    $region29: #{tpu_custom_call.1} parent=1 // pred_fallthru
      _
    // Predicated region
    $region30: #{tpu_custom_call.1} parent=1 // pred_check
      _
    $region31: #{tpu_custom_call.1} parent=1 // pred_check_branch
      %65 = sbr.rel (0) target = $region33
    $region32: #{tpu_custom_call.1} parent=1 // pred_region
      %67 = dma.done [#allocation6], 1024
    $region33: #{tpu_custom_call.1} parent=1 // pred_fallthru
      _
    %v68 = vld [vmem:[#allocation2] sm:$0xf]
    %v69 = vld [vmem:[#allocation2 + $0x4] sm:$0xf]
    %v70 = vld [vmem:[#allocation5] sm:$0xf]
    %v71 = vld [vmem:[#allocation5 + $0x4] sm:$0xf]
    %v72 = vld [vmem:[#allocation5 + $0x8] sm:$0xf]
    %v73 = vld [vmem:[#allocation5 + $0xc] sm:$0xf]
    %v74 = vld [vmem:[#allocation5 + $0x10] sm:$0xf]
    %v75 = vld [vmem:[#allocation5 + $0x14] sm:$0xf]
    %v76 = vld [vmem:[#allocation5 + $0x18] sm:$0xf]
    %v77 = vld [vmem:[#allocation5 + $0x1c] sm:$0xf]
    %v78 = vld [vmem:[#allocation5 + $0x20] sm:$0xf]
    %v79 = vld [vmem:[#allocation5 + $0x24] sm:$0xf]
    %v80 = vld [vmem:[#allocation5 + $0x28] sm:$0xf]
    %v81 = vld [vmem:[#allocation5 + $0x2c] sm:$0xf]
    %v82 = vld [vmem:[#allocation5 + $0x30] sm:$0xf]
    %v83 = vld [vmem:[#allocation5 + $0x34] sm:$0xf]
    %v84 = vld [vmem:[#allocation5 + $0x38] sm:$0xf]
    %v85 = vld [vmem:[#allocation5 + $0x3c] sm:$0xf]
    %v86 = vld [vmem:[%s2] sm:$0x1]
    %v88 = vperm.slane %v86, 0
    %v92 = vunpack.c.l.b16 %v68
    %v93 = vunpack.c.l.b16 %v69
    %v94 = vpack.c.b16 %v93, %v92
    %v112 = vunpack.c.l.b16 %v70
    %v113 = vunpack.c.l.b16 %v71
    %v114 = vunpack.c.l.b16 %v72
    %v115 = vunpack.c.l.b16 %v73
    %v116 = vunpack.c.l.b16 %v74
    %v117 = vunpack.c.l.b16 %v75
    %v118 = vunpack.c.l.b16 %v76
    %v119 = vunpack.c.l.b16 %v77
    %v120 = vunpack.c.l.b16 %v78
    %v121 = vunpack.c.l.b16 %v79
    %v122 = vunpack.c.l.b16 %v80
    %v123 = vunpack.c.l.b16 %v81
    %v124 = vunpack.c.l.b16 %v82
    %v125 = vunpack.c.l.b16 %v83
    %v126 = vunpack.c.l.b16 %v84
    %v127 = vunpack.c.l.b16 %v85
    %v128 = vpack.c.b16 %v113, %v112
    %v129 = vpack.c.b16 %v115, %v114
    %v130 = vpack.c.b16 %v117, %v116
    %v131 = vpack.c.b16 %v119, %v118
    %v132 = vpack.c.b16 %v121, %v120
    %v133 = vpack.c.b16 %v123, %v122
    %v134 = vpack.c.b16 %v125, %v124
    %v135 = vpack.c.b16 %v127, %v126
    %144 = vmatpush.bf16.msra.mxu0 %v135
    %145 = vmatpush.bf16.msra.mxu0 %v134
    %146 = vmatpush.bf16.msra.mxu0 %v133
    %147 = vmatpush.bf16.msra.mxu0 %v132
    %148 = vmatpush.bf16.msra.mxu0 %v131
    %149 = vmatpush.bf16.msra.mxu0 %v130
    %150 = vmatpush.bf16.msra.mxu0 %v129
    %151 = vmatpush.bf16.msra.mxu0 %v128
    %152 = vmatmul.bf16.gmra.mxu0 %v94
    %v153 = vpop.f32.mrf.mxu0
    %v154 = vadd.f32 %v88, %v153
    %v155 = vpop.f32.mrf.mxu0
    %v156 = vadd.f32 %v88, %v155
    %157 = vdwg.mxu0
    %v158 = vmul.f32 %v154, 0.5
    %v159 = vmul.f32 %v156, 0.5
    %v160 = vmul.f32 %v154, 0.70710677
    %v161 = vmul.f32 %v156, 0.70710677
    %v162 = vmul.f32 %v160, %v160
    %v163 = vmin.f32 16.0, %v162
    %v164 = vmul.f32 %v163, 2.1237322e-06
    %v165 = vadd.f32 %v164, 0.00028619796
    %v166 = vmul.f32 %v163, %v165
    %v167 = vadd.f32 %v166, 0.0036580483
    %v168 = vmul.f32 %v163, %v167
    %v169 = vadd.f32 %v168, 0.05243302
    %v170 = vmul.f32 %v163, %v169
    %v171 = vadd.f32 %v170, 0.18741608
    %v172 = vmul.f32 %v163, %v171
    %v173 = vadd.f32 %v172, 1.1283791
    %v174 = vmul.f32 %v160, %v173
    %v175 = vmul.f32 %v163, 3.8918573e-05
    %v176 = vadd.f32 %v175, 0.001143296
    %v177 = vmul.f32 %v163, %v176
    %v178 = vadd.f32 %v177, 0.014752088
    %v179 = vmul.f32 %v163, %v178
    %v180 = vadd.f32 %v179, 0.112945676
    %v181 = vmul.f32 %v163, %v180
    %v182 = vadd.f32 %v181, 0.4994258
    %v183 = vmul.f32 %v163, %v182
    %v184 = vadd.f32 %v183, 1.0
    %v185 = vrcp.pop %v184
    %v186 = vmul.f32 %v184, %v185
    %v187 = vsub.f32 1.0, %v186
    %v188 = vmul.f32 %v185, %v187
    %v189 = vadd.f32 %v185, %v188
    %vm190 = vweird.f32 %v184
    %vm191 = vweird.f32 %v185
    %vm192 = vmor %vm190, %vm191
    %v193 = vsel %vm192, %v185, %v189
    %v194 = vand.u32 2147483647, %v184
    %vm195 = vcmp.eq.f32.partialorder %v194, 8.507059e+37
    %v196 = vand.u32 %v184, 2147483648
    %v197 = vor.u32 1.1754944e-38, %v196
    %v198 = vsel %vm195, %v197, %v193
    %v199 = vmul.f32 %v174, %v198
    %v200 = vmin.f32 %v199, 1.0
    %v201 = vmax.f32 %v200, -1.0
    %v202 = vmul.f32 %v161, %v161
    %v203 = vmin.f32 16.0, %v202
    %v204 = vmul.f32 %v203, 2.1237322e-06
    %v205 = vadd.f32 %v204, 0.00028619796
    %v206 = vmul.f32 %v203, %v205
    %v207 = vadd.f32 %v206, 0.0036580483
    %v208 = vmul.f32 %v203, %v207
    %v209 = vadd.f32 %v208, 0.05243302
    %v210 = vmul.f32 %v203, %v209
    %v211 = vadd.f32 %v210, 0.18741608
    %v212 = vmul.f32 %v203, %v211
    %v213 = vadd.f32 %v212, 1.1283791
    %v214 = vmul.f32 %v161, %v213
    %v215 = vmul.f32 %v203, 3.8918573e-05
    %v216 = vadd.f32 %v215, 0.001143296
    %v217 = vmul.f32 %v203, %v216
    %v218 = vadd.f32 %v217, 0.014752088
    %v219 = vmul.f32 %v203, %v218
    %v220 = vadd.f32 %v219, 0.112945676
    %v221 = vmul.f32 %v203, %v220
    %v222 = vadd.f32 %v221, 0.4994258
    %v223 = vmul.f32 %v203, %v222
    %v224 = vadd.f32 %v223, 1.0
    %v225 = vrcp.pop %v224
    %v226 = vmul.f32 %v224, %v225
    %v227 = vsub.f32 1.0, %v226
    %v228 = vmul.f32 %v225, %v227
    %v229 = vadd.f32 %v225, %v228
    %vm230 = vweird.f32 %v224
    %vm231 = vweird.f32 %v225
    %vm232 = vmor %vm230, %vm231
    %v233 = vsel %vm232, %v225, %v229
    %v234 = vand.u32 2147483647, %v224
    %vm235 = vcmp.eq.f32.partialorder %v234, 8.507059e+37
    %v236 = vand.u32 %v224, 2147483648
    %v237 = vor.u32 1.1754944e-38, %v236
    %v238 = vsel %vm235, %v237, %v233
    %v239 = vmul.f32 %v214, %v238
    %v240 = vmin.f32 %v239, 1.0
    %v241 = vmax.f32 %v240, -1.0
    %v242 = vadd.f32 %v201, 1.0
    %v243 = vadd.f32 %v241, 1.0
    %v244 = vmul.f32 %v158, %v242
    %v245 = vmul.f32 %v159, %v243
    %v246 = vpack.c.bf16 %v245, %v244
    %v247 = vld [vmem:[#allocation7] sm:$0xf]
    %v248 = vld [vmem:[#allocation7 + $0x4] sm:$0xf]
    %v249 = vld [vmem:[#allocation7 + $0x8] sm:$0xf]
    %v250 = vld [vmem:[#allocation7 + $0xc] sm:$0xf]
    %v251 = vld [vmem:[#allocation7 + $0x10] sm:$0xf]
    %v252 = vld [vmem:[#allocation7 + $0x14] sm:$0xf]
    %v253 = vld [vmem:[#allocation7 + $0x18] sm:$0xf]
    %v254 = vld [vmem:[#allocation7 + $0x1c] sm:$0xf]
    %v255 = vld [vmem:[#allocation7 + $0x20] sm:$0xf]
    %v256 = vld [vmem:[#allocation7 + $0x24] sm:$0xf]
    %v257 = vld [vmem:[#allocation7 + $0x28] sm:$0xf]
    %v258 = vld [vmem:[#allocation7 + $0x2c] sm:$0xf]
    %v259 = vld [vmem:[#allocation7 + $0x30] sm:$0xf]
    %v260 = vld [vmem:[#allocation7 + $0x34] sm:$0xf]
    %v261 = vld [vmem:[#allocation7 + $0x38] sm:$0xf]
    %v262 = vld [vmem:[#allocation7 + $0x3c] sm:$0xf]
    %v263 = vld [vmem:[%s4] sm:$0x1]
    %v265 = vperm.slane %v263, 0
    %v283 = vunpack.c.l.b16 %v247
    %v284 = vunpack.c.l.b16 %v248
    %v285 = vunpack.c.l.b16 %v249
    %v286 = vunpack.c.l.b16 %v250
    %v287 = vunpack.c.l.b16 %v251
    %v288 = vunpack.c.l.b16 %v252
    %v289 = vunpack.c.l.b16 %v253
    %v290 = vunpack.c.l.b16 %v254
    %v291 = vunpack.c.l.b16 %v255
    %v292 = vunpack.c.l.b16 %v256
    %v293 = vunpack.c.l.b16 %v257
    %v294 = vunpack.c.l.b16 %v258
    %v295 = vunpack.c.l.b16 %v259
    %v296 = vunpack.c.l.b16 %v260
    %v297 = vunpack.c.l.b16 %v261
    %v298 = vunpack.c.l.b16 %v262
    %v299 = vpack.c.b16 %v284, %v283
    %v300 = vpack.c.b16 %v286, %v285
    %v301 = vpack.c.b16 %v288, %v287
    %v302 = vpack.c.b16 %v290, %v289
    %v303 = vpack.c.b16 %v292, %v291
    %v304 = vpack.c.b16 %v294, %v293
    %v305 = vpack.c.b16 %v296, %v295
    %v306 = vpack.c.b16 %v298, %v297
    %315 = vmatpush.bf16.msra.mxu0 %v306
    %316 = vmatpush.bf16.msra.mxu0 %v305
    %317 = vmatpush.bf16.msra.mxu0 %v304
    %318 = vmatpush.bf16.msra.mxu0 %v303
    %319 = vmatpush.bf16.msra.mxu0 %v302
    %320 = vmatpush.bf16.msra.mxu0 %v301
    %321 = vmatpush.bf16.msra.mxu0 %v300
    %322 = vmatpush.bf16.msra.mxu0 %v299
    %323 = vmatmul.bf16.gmra.mxu0 %v246
    %v324 = vpop.f32.mrf.mxu0
    %v325 = vadd.f32 %v265, %v324
    %v326 = vpop.f32.mrf.mxu0
    %v327 = vadd.f32 %v265, %v326
    %328 = vdwg.mxu0
    %v329 = vmul.f32 %v325, 0.5
    %v330 = vmul.f32 %v327, 0.5
    %v331 = vmul.f32 %v325, 0.70710677
    %v332 = vmul.f32 %v327, 0.70710677
    %v333 = vmul.f32 %v331, %v331
    %v334 = vmin.f32 16.0, %v333
    %v335 = vmul.f32 %v334, 2.1237322e-06
    %v336 = vadd.f32 %v335, 0.00028619796
    %v337 = vmul.f32 %v334, %v336
    %v338 = vadd.f32 %v337, 0.0036580483
    %v339 = vmul.f32 %v334, %v338
    %v340 = vadd.f32 %v339, 0.05243302
    %v341 = vmul.f32 %v334, %v340
    %v342 = vadd.f32 %v341, 0.18741608
    %v343 = vmul.f32 %v334, %v342
    %v344 = vadd.f32 %v343, 1.1283791
    %v345 = vmul.f32 %v331, %v344
    %v346 = vmul.f32 %v334, 3.8918573e-05
    %v347 = vadd.f32 %v346, 0.001143296
    %v348 = vmul.f32 %v334, %v347
    %v349 = vadd.f32 %v348, 0.014752088
    %v350 = vmul.f32 %v334, %v349
    %v351 = vadd.f32 %v350, 0.112945676
    %v352 = vmul.f32 %v334, %v351
    %v353 = vadd.f32 %v352, 0.4994258
    %v354 = vmul.f32 %v334, %v353
    %v355 = vadd.f32 %v354, 1.0
    %v356 = vrcp.pop %v355
    %v357 = vmul.f32 %v355, %v356
    %v358 = vsub.f32 1.0, %v357
    %v359 = vmul.f32 %v356, %v358
    %v360 = vadd.f32 %v356, %v359
    %vm361 = vweird.f32 %v355
    %vm362 = vweird.f32 %v356
    %vm363 = vmor %vm361, %vm362
    %v364 = vsel %vm363, %v356, %v360
    %v365 = vand.u32 2147483647, %v355
    %vm366 = vcmp.eq.f32.partialorder %v365, 8.507059e+37
    %v367 = vand.u32 %v355, 2147483648
    %v368 = vor.u32 1.1754944e-38, %v367
    %v369 = vsel %vm366, %v368, %v364
    %v370 = vmul.f32 %v345, %v369
    %v371 = vmin.f32 %v370, 1.0
    %v372 = vmax.f32 %v371, -1.0
    %v373 = vmul.f32 %v332, %v332
    %v374 = vmin.f32 16.0, %v373
    %v375 = vmul.f32 %v374, 2.1237322e-06
    %v376 = vadd.f32 %v375, 0.00028619796
    %v377 = vmul.f32 %v374, %v376
    %v378 = vadd.f32 %v377, 0.0036580483
    %v379 = vmul.f32 %v374, %v378
    %v380 = vadd.f32 %v379, 0.05243302
    %v381 = vmul.f32 %v374, %v380
    %v382 = vadd.f32 %v381, 0.18741608
    %v383 = vmul.f32 %v374, %v382
    %v384 = vadd.f32 %v383, 1.1283791
    %v385 = vmul.f32 %v332, %v384
    %v386 = vmul.f32 %v374, 3.8918573e-05
    %v387 = vadd.f32 %v386, 0.001143296
    %v388 = vmul.f32 %v374, %v387
    %v389 = vadd.f32 %v388, 0.014752088
    %v390 = vmul.f32 %v374, %v389
    %v391 = vadd.f32 %v390, 0.112945676
    %v392 = vmul.f32 %v374, %v391
    %v393 = vadd.f32 %v392, 0.4994258
    %v394 = vmul.f32 %v374, %v393
    %v395 = vadd.f32 %v394, 1.0
    %v396 = vrcp.pop %v395
    %v397 = vmul.f32 %v395, %v396
    %v398 = vsub.f32 1.0, %v397
    %v399 = vmul.f32 %v396, %v398
    %v400 = vadd.f32 %v396, %v399
    %vm401 = vweird.f32 %v395
    %vm402 = vweird.f32 %v396
    %vm403 = vmor %vm401, %vm402
    %v404 = vsel %vm403, %v396, %v400
    %v405 = vand.u32 2147483647, %v395
    %vm406 = vcmp.eq.f32.partialorder %v405, 8.507059e+37
    %v407 = vand.u32 %v395, 2147483648
    %v408 = vor.u32 1.1754944e-38, %v407
    %v409 = vsel %vm406, %v408, %v404
    %v410 = vmul.f32 %v385, %v409
    %v411 = vmin.f32 %v410, 1.0
    %v412 = vmax.f32 %v411, -1.0
    %v413 = vadd.f32 %v372, 1.0
    %v414 = vadd.f32 %v412, 1.0
    %v415 = vmul.f32 %v329, %v413
    %v416 = vmul.f32 %v330, %v414
    %417 = vst [vmem:[#allocation8] sm:$0xff] %v415
    %418 = vst [vmem:[#allocation8 + $0x8] sm:$0xff] %v416
    // Predicated region
    $region34: #{tpu_custom_call.1} parent=1 // pred_check
      _
    $region35: #{tpu_custom_call.1} parent=1 // pred_check_branch
      %420 = sbr.rel (0) target = $region37
    $region36: #{tpu_custom_call.1} parent=1 // pred_region
      %422 = vsyncadd [#allocation4], 0
      %s423 = sshll.u32 [#allocation8], 4
      %s424 = int_to_ptr.vmem [resolvable:$true] %s423
      %s425 = sshll.u32 %s5, 4
      %s426 = int_to_ptr.hbm [resolvable:$true] %s425
      %431 = dma.vmem_to_hbm [thread:$0]  %s424, 256, %s426, [#allocation4], 128, 128, 8
    $region37: #{tpu_custom_call.1} parent=1 // pred_fallthru
      _
    // Predicated region
    $region38: #{tpu_custom_call.1} parent=1 // pred_check
      _
    $region39: #{tpu_custom_call.1} parent=1 // pred_check_branch
      %433 = sbr.rel (0) target = $region41
    $region40: #{tpu_custom_call.1} parent=1 // pred_region
      %435 = dma.done [#allocation4], 256
    $region41: #{tpu_custom_call.1} parent=1 // pred_fallthru
      _
    %436 = vsyncpa [#allocation3], 1
    %437 = vsyncpa [#allocation6], 1
    %438 = vsyncpa [#allocation4], 1

</llo_original>
